<compile_context>
chip_gen: v5e
topology: v5e:2x2
jax: 0.10.0
libtpu: 0.0.40
codegen_flags: <defaults>
</compile_context>

<pallas_src>
import jax
import jax.numpy as jnp
from jax.experimental import pallas as pl
from jax.experimental.pallas import tpu as pltpu


def _mlp_kernel(u_ref, s_ref, c_ref,          # activation tiles: (TB, d_u/d_s/d_c)
                w1u_ref, w1s_ref, w1c_ref,    # fc1 weight, split along K
                b1_ref,                       # (1, hidden) f32
                w2_ref,                       # (1, hidden) f32  (fc2 weight as a row)
                b2_ref,                       # (1, 1) f32 scalar in SMEM
                o_ref):                       # (1, TB) f32  (lane-dense score row)
    # --- fc1 as a split-K matmul (== concat(u,s,c) @ W1), accumulate in f32 on MXU ---
    h = jnp.dot(u_ref[...], w1u_ref[...], preferred_element_type=jnp.float32)
    h += jnp.dot(s_ref[...], w1s_ref[...], preferred_element_type=jnp.float32)
    h += jnp.dot(c_ref[...], w1c_ref[...], preferred_element_type=jnp.float32)
    h = jnp.maximum(h + b1_ref[...], 0.0)                       # ReLU, (TB, hidden) f32

    # --- fc2 (out_features=1): VPU multiply + lane reduce instead of an N=1 matmul ---
    s_col = jnp.sum(h * w2_ref[...], axis=-1, keepdims=True)    # (TB, 1)

    # Lane-dense store: one (1, TB) row of scores per grid step.
    o_ref[...] = (s_col.T + b2_ref[0, 0]).astype(o_ref.dtype)


def _pick_block_b(batch):
    # >=512 rows reaches ~85% of HBM roofline; keep the tile small for tiny batches.
    if batch <= 128:
        return 128
    if batch <= 256:
        return 256
    return 512


def recommendation_net_forward(user_emb, song_emb, ctx_vec, params,
                               *, compute_dtype=jnp.float32, block_b=None):
    """Fused forward: (implicit concat) -> fc1 -> relu -> fc2. Returns [B, 1] f32."""
    w1, b1, w2, b2 = params
    user_dim = user_emb.shape[-1]
    song_dim = song_emb.shape[-1]
    ctx_dim = ctx_vec.shape[-1]
    input_dim, hidden_dim = w1.shape
    assert input_dim == user_dim + song_dim + ctx_dim

    B = user_emb.shape[0]
    if block_b is None:
        block_b = _pick_block_b(B)
    num_tiles = pl.cdiv(B, block_b)
    b_pad = num_tiles * block_b

    def pad_batch(a):
        return a if b_pad == B else jnp.pad(a, ((0, b_pad - B), (0, 0)))

    # Activation stream (optionally bf16 to halve HBM bytes; accumulation stays f32).
    u = pad_batch(user_emb).astype(compute_dtype)
    s = pad_batch(song_emb).astype(compute_dtype)
    c = pad_batch(ctx_vec).astype(compute_dtype)

    # Split fc1 weight along its K (input) axis -- replaces the HBM concat.
    w1u = w1[:user_dim].astype(compute_dtype)
    w1s = w1[user_dim:user_dim + song_dim].astype(compute_dtype)
    w1c = w1[user_dim + song_dim:].astype(compute_dtype)
    # Elementwise epilogue stays f32 (friendly to v5e's non-bf16 VPU).
    b1_row = b1.reshape(1, hidden_dim).astype(jnp.float32)
    w2_row = w2.reshape(1, hidden_dim).astype(jnp.float32)
    b2_scalar = b2.reshape(1, 1).astype(jnp.float32)

    act_bytes = jnp.dtype(compute_dtype).itemsize
    cost = pl.CostEstimate(
        flops=2 * b_pad * input_dim * hidden_dim + 2 * b_pad * hidden_dim,
        transcendentals=0,
        bytes_accessed=(b_pad * input_dim * act_bytes          # activation stream
                        + b_pad * 4                            # scores out
                        + input_dim * hidden_dim * act_bytes   # fc1 weight
                        + (2 * hidden_dim + 1) * 4),           # b1, w2, b2
    )

    def resident(shape):  # weight/bias blocks: same block every grid step -> no re-DMA
        return pl.BlockSpec(shape, lambda i: (0, 0))

    scores = pl.pallas_call(
        _mlp_kernel,
        out_shape=jax.ShapeDtypeStruct((num_tiles, 1, block_b), jnp.float32),
        grid=(num_tiles,),
        in_specs=[
            pl.BlockSpec((block_b, user_dim), lambda i: (i, 0)),
            pl.BlockSpec((block_b, song_dim), lambda i: (i, 0)),
            pl.BlockSpec((block_b, ctx_dim), lambda i: (i, 0)),
            resident((user_dim, hidden_dim)),
            resident((song_dim, hidden_dim)),
            resident((ctx_dim, hidden_dim)),
            resident((1, hidden_dim)),
            resident((1, hidden_dim)),
            pl.BlockSpec(memory_space=pltpu.MemorySpace.SMEM),   # b2 scalar
        ],
        # Lane-dense (1, TB) score row per step; leading tile dim squeezed in-kernel.
        out_specs=pl.BlockSpec((None, 1, block_b), lambda i: (i, 0, 0)),
        compiler_params=pltpu.CompilerParams(
            dimension_semantics=("parallel",),      # batch axis -> both TCs on v7x
            vmem_limit_bytes=32 * 1024 * 1024,      # explicit (raises v5e's 16 MiB default)
        ),
        cost_estimate=cost,
    )(u, s, c, w1u, w1s, w1c, b1_row, w2_row, b2_scalar)

    # (num_tiles, 1, TB) row-major == batch order; drop padding rows.
    return scores.reshape(b_pad, 1)[:B]


def init_params(key, user_dim, song_dim, context_dim, hidden_dim=64):
    """Deterministic init mimicking nn.Linear (uniform +/- 1/sqrt(fan_in))."""
    input_dim = user_dim + song_dim + context_dim
    k1, k2, k3, k4 = jax.random.split(key, 4)
    bound1 = 1.0 / jnp.sqrt(input_dim)
    bound2 = 1.0 / jnp.sqrt(hidden_dim)
    # Stored as [in, out] so the kernel does x @ w (PyTorch stores [out, in]).
    w1 = jax.random.uniform(k1, (input_dim, hidden_dim), jnp.float32, -bound1, bound1)
    b1 = jax.random.uniform(k2, (1, hidden_dim), jnp.float32, -bound1, bound1)
    w2 = jax.random.uniform(k3, (hidden_dim, 1), jnp.float32, -bound2, bound2)
    b2 = jax.random.uniform(k4, (1, 1), jnp.float32, -bound2, bound2)
    return w1, b1, w2, b2


if __name__ == "__main__":
    key = jax.random.PRNGKey(0)
    user_dim, song_dim, context_dim, hidden_dim = 16, 32, 8, 64

    kp, ku, ks, kc = jax.random.split(key, 4)
    params = init_params(kp, user_dim, song_dim, context_dim, hidden_dim)
    w1, b1, w2, b2 = params

    def reference(u, s, c):
        x = jnp.concatenate([u, s, c], axis=-1)
        return jnp.maximum(x @ w1 + b1, 0.0) @ w2 + b2

    # Small shapes consistent with the module.
    B = 4
    user_emb = jax.random.normal(ku, (B, user_dim), jnp.float32)
    song_emb = jax.random.normal(ks, (B, song_dim), jnp.float32)
    ctx_vec = jax.random.normal(kc, (B, context_dim), jnp.float32)

    score = jax.block_until_ready(
        recommendation_net_forward(user_emb, song_emb, ctx_vec, params))
    assert score.shape == (B, 1)
    assert jnp.allclose(score, reference(user_emb, song_emb, ctx_vec),
                        atol=1e-4, rtol=1e-4)

    # Multi-tile grid + non-multiple batch (exercises tiling, padding, parallel axis).
    B2 = 300
    ku2, ks2, kc2 = jax.random.split(jax.random.PRNGKey(1), 3)
    u2 = jax.random.normal(ku2, (B2, user_dim), jnp.float32)
    s2 = jax.random.normal(ks2, (B2, song_dim), jnp.float32)
    c2 = jax.random.normal(kc2, (B2, context_dim), jnp.float32)
    score2 = jax.block_until_ready(
        recommendation_net_forward(u2, s2, c2, params, block_b=128))
    assert score2.shape == (B2, 1)
    assert jnp.allclose(score2, reference(u2, s2, c2), atol=1e-4, rtol=1e-4)

    # bf16 activation/weight stream (mem-bound roofline win on v6e/v7x); looser tol.
    score_bf16 = jax.block_until_ready(
        recommendation_net_forward(user_emb, song_emb, ctx_vec, params,
                                   compute_dtype=jnp.bfloat16))
    assert jnp.allclose(score_bf16, reference(user_emb, song_emb, ctx_vec),
                        atol=1e-1, rtol=1e-1)

    print("KERNEL_OK")
</pallas_src>

<mosaic_0001>
module attributes {stable_mosaic.version = 11 : i64} {
  func.func @_mlp_kernel(%arg0: i32, %arg1: memref<128x16xf32, #tpu.memory_space<vmem>>, %arg2: memref<128x32xf32, #tpu.memory_space<vmem>>, %arg3: memref<128x8xf32, #tpu.memory_space<vmem>>, %arg4: memref<16x64xf32, #tpu.memory_space<vmem>>, %arg5: memref<32x64xf32, #tpu.memory_space<vmem>>, %arg6: memref<8x64xf32, #tpu.memory_space<vmem>>, %arg7: memref<1x64xf32, #tpu.memory_space<vmem>>, %arg8: memref<1x64xf32, #tpu.memory_space<vmem>>, %arg9: memref<1x1xf32, #tpu.memory_space<smem>>, %arg10: memref<1x1x128xf32, #tpu.memory_space<vmem>>) attributes {dimension_semantics = [#tpu.dimension_semantics<parallel>], iteration_bounds = array<i64: 1>, scalar_prefetch = 0 : i64, scratch_operands = 0 : i64, tpu.core_type = #tpu.core_type<tc>, window_params = [{transform_indices = @transform_0, window_bounds = array<i64: 128, 16>}, {transform_indices = @transform_1, window_bounds = array<i64: 128, 32>}, {transform_indices = @transform_2, window_bounds = array<i64: 128, 8>}, {pipeline_mode = #tpu.pipeline_mode<synchronous>, transform_indices = @transform_3, window_bounds = array<i64: 16, 64>}, {pipeline_mode = #tpu.pipeline_mode<synchronous>, transform_indices = @transform_4, window_bounds = array<i64: 32, 64>}, {pipeline_mode = #tpu.pipeline_mode<synchronous>, transform_indices = @transform_5, window_bounds = array<i64: 8, 64>}, {pipeline_mode = #tpu.pipeline_mode<synchronous>, transform_indices = @transform_6, window_bounds = array<i64: 1, 64>}, {pipeline_mode = #tpu.pipeline_mode<synchronous>, transform_indices = @transform_7, window_bounds = array<i64: 1, 64>}, {transform_indices = @transform_8, window_bounds = array<i64: 1, 1>}, {transform_indices = @transform_9, window_bounds = array<i64: 1, 1, 128>}]} {
    %c0 = arith.constant 0 : index
    %c0_0 = arith.constant 0 : index
    %0 = vector.load %arg1[%c0, %c0_0] : memref<128x16xf32, #tpu.memory_space<vmem>>, vector<128x16xf32>
    %c0_1 = arith.constant 0 : index
    %c0_2 = arith.constant 0 : index
    %1 = vector.load %arg4[%c0_1, %c0_2] : memref<16x64xf32, #tpu.memory_space<vmem>>, vector<16x64xf32>
    %cst = arith.constant dense<0.000000e+00> : vector<128x64xf32>
    %2 = tpu.matmul %0, %1, %cst {dimension_numbers = #tpu.dot_dimension_numbers<[1], [0], [0], [1], [0, 0, 1, 1], [], []>} : vector<128x16xf32>, vector<16x64xf32>, vector<128x64xf32> -> vector<128x64xf32>
    %c0_3 = arith.constant 0 : index
    %c0_4 = arith.constant 0 : index
    %3 = vector.load %arg2[%c0_3, %c0_4] : memref<128x32xf32, #tpu.memory_space<vmem>>, vector<128x32xf32>
    %c0_5 = arith.constant 0 : index
    %c0_6 = arith.constant 0 : index
    %4 = vector.load %arg5[%c0_5, %c0_6] : memref<32x64xf32, #tpu.memory_space<vmem>>, vector<32x64xf32>
    %cst_7 = arith.constant dense<0.000000e+00> : vector<128x64xf32>
    %5 = tpu.matmul %3, %4, %cst_7 {dimension_numbers = #tpu.dot_dimension_numbers<[1], [0], [0], [1], [0, 0, 1, 1], [], []>} : vector<128x32xf32>, vector<32x64xf32>, vector<128x64xf32> -> vector<128x64xf32>
    %6 = arith.addf %2, %5 : vector<128x64xf32>
    %c0_8 = arith.constant 0 : index
    %c0_9 = arith.constant 0 : index
    %7 = vector.load %arg3[%c0_8, %c0_9] : memref<128x8xf32, #tpu.memory_space<vmem>>, vector<128x8xf32>
    %c0_10 = arith.constant 0 : index
    %c0_11 = arith.constant 0 : index
    %8 = vector.load %arg6[%c0_10, %c0_11] : memref<8x64xf32, #tpu.memory_space<vmem>>, vector<8x64xf32>
    %cst_12 = arith.constant dense<0.000000e+00> : vector<128x64xf32>
    %9 = tpu.matmul %7, %8, %cst_12 {dimension_numbers = #tpu.dot_dimension_numbers<[1], [0], [0], [1], [0, 0, 1, 1], [], []>} : vector<128x8xf32>, vector<8x64xf32>, vector<128x64xf32> -> vector<128x64xf32>
    %10 = arith.addf %6, %9 : vector<128x64xf32>
    %c0_13 = arith.constant 0 : index
    %c0_14 = arith.constant 0 : index
    %11 = vector.load %arg7[%c0_13, %c0_14] : memref<1x64xf32, #tpu.memory_space<vmem>>, vector<1x64xf32>
    %12 = vector.broadcast %11 : vector<1x64xf32> to vector<128x64xf32>
    %13 = arith.addf %10, %12 : vector<128x64xf32>
    %cst_15 = arith.constant 0.000000e+00 : f32
    %14 = vector.broadcast %cst_15 : f32 to vector<128x64xf32>
    %15 = arith.maximumf %13, %14 : vector<128x64xf32>
    %c0_16 = arith.constant 0 : index
    %c0_17 = arith.constant 0 : index
    %16 = vector.load %arg8[%c0_16, %c0_17] : memref<1x64xf32, #tpu.memory_space<vmem>>, vector<1x64xf32>
    %17 = vector.broadcast %16 : vector<1x64xf32> to vector<128x64xf32>
    %18 = arith.mulf %15, %17 : vector<128x64xf32>
    %cst_18 = arith.constant dense<0.000000e+00> : vector<128xf32>
    %19 = vector.multi_reduction <add>, %18, %cst_18 [1] : vector<128x64xf32> to vector<128xf32>
    %20 = vector.shape_cast %19 : vector<128xf32> to vector<128x1xf32>
    %21 = tpu.transpose %20, [1, 0] : vector<128x1xf32> -> vector<1x128xf32>
    %c0_19 = arith.constant 0 : index
    %c0_20 = arith.constant 0 : index
    %22 = memref.load %arg9[%c0_19, %c0_20] : memref<1x1xf32, #tpu.memory_space<smem>>
    %23 = vector.broadcast %22 : f32 to vector<1x128xf32>
    %24 = arith.addf %21, %23 : vector<1x128xf32>
    %c0_21 = arith.constant 0 : index
    %c0_22 = arith.constant 0 : index
    %c0_23 = arith.constant 0 : index
    %25 = vector.load %arg10[%c0_21, %c0_22, %c0_23] : memref<1x1x128xf32, #tpu.memory_space<vmem>>, vector<1x1x128xf32>
    %26 = vector.shape_cast %25 : vector<1x1x128xf32> to vector<1x128xf32>
    %27 = vector.shape_cast %24 : vector<1x128xf32> to vector<1x1x128xf32>
    tpu.vector_store %arg10[%c0_21, %c0_22, %c0_23], %27 {strides = array<i32>} : memref<1x1x128xf32, #tpu.memory_space<vmem>>, vector<1x1x128xf32>,
    return
  }
  func.func @transform_0(%arg0: i32) -> (i32, i32) {
    %c0_i32 = arith.constant 0 : i32
    %c0_i32_0 = arith.constant 0 : i32
    return %arg0, %c0_i32 : i32, i32
  }
  func.func @transform_1(%arg0: i32) -> (i32, i32) {
    %c0_i32 = arith.constant 0 : i32
    %c0_i32_0 = arith.constant 0 : i32
    return %arg0, %c0_i32 : i32, i32
  }
  func.func @transform_2(%arg0: i32) -> (i32, i32) {
    %c0_i32 = arith.constant 0 : i32
    %c0_i32_0 = arith.constant 0 : i32
    return %arg0, %c0_i32 : i32, i32
  }
  func.func @transform_3(%arg0: i32) -> (i32, i32) {
    %c0_i32 = arith.constant 0 : i32
    %c0_i32_0 = arith.constant 0 : i32
    %c0_i32_1 = arith.constant 0 : i32
    return %c0_i32, %c0_i32_0 : i32, i32
  }
  func.func @transform_4(%arg0: i32) -> (i32, i32) {
    %c0_i32 = arith.constant 0 : i32
    %c0_i32_0 = arith.constant 0 : i32
    %c0_i32_1 = arith.constant 0 : i32
    return %c0_i32, %c0_i32_0 : i32, i32
  }
  func.func @transform_5(%arg0: i32) -> (i32, i32) {
    %c0_i32 = arith.constant 0 : i32
    %c0_i32_0 = arith.constant 0 : i32
    %c0_i32_1 = arith.constant 0 : i32
    return %c0_i32, %c0_i32_0 : i32, i32
  }
  func.func @transform_6(%arg0: i32) -> (i32, i32) {
    %c0_i32 = arith.constant 0 : i32
    %c0_i32_0 = arith.constant 0 : i32
    %c0_i32_1 = arith.constant 0 : i32
    return %c0_i32, %c0_i32_0 : i32, i32
  }
  func.func @transform_7(%arg0: i32) -> (i32, i32) {
    %c0_i32 = arith.constant 0 : i32
    %c0_i32_0 = arith.constant 0 : i32
    %c0_i32_1 = arith.constant 0 : i32
    return %c0_i32, %c0_i32_0 : i32, i32
  }
  func.func @transform_8(%arg0: i32) -> (i32, i32) {
    %c0_i32 = arith.constant 0 : i32
    %c0_i32_0 = arith.constant 0 : i32
    %c0_i32_1 = arith.constant 0 : i32
    return %c0_i32, %c0_i32_0 : i32, i32
  }
  func.func @transform_9(%arg0: i32) -> (i32, i32, i32) {
    %c0_i32 = arith.constant 0 : i32
    %c0_i32_0 = arith.constant 0 : i32
    %c0_i32_1 = arith.constant 0 : i32
    return %arg0, %c0_i32, %c0_i32_0 : i32, i32, i32
  }
}

</mosaic_0001>

<llo_original>
// kernel: tpu_custom_call.1
$region0: #{tpu_custom_call.1}
  #allocation0 [shape = 'u32[]', space=smem, size = 0x4, offset = 0x4, fixed_abs, tag = 'smem constant byte address 0x4 - core index']
  #allocation1 [shape = 'u32[72,128]{1,0:T(1,128)}', space=vmem, size = 0x9000, scoped, tag = 'internal scratch']
  #allocation2 [shape = 'f32[1,1]{1,0:T(1,128)S(6)}', space=smem, size = 0x200, scoped, tag = 'scoped memory for tpu_custom_call.1']
  %s0 = inlined_call_operand.vmem [shape: f32[128,16], index: 0, kind: input, shape index: {}]
  %s1 = inlined_call_operand.vmem [shape: f32[128,32], index: 1, kind: input, shape index: {}]
  %s2 = inlined_call_operand.vmem [shape: f32[128,8], index: 2, kind: input, shape index: {}]
  %s3 = inlined_call_operand.vmem [shape: f32[16,64], index: 3, kind: input, shape index: {}]
  %s4 = inlined_call_operand.vmem [shape: f32[32,64], index: 4, kind: input, shape index: {}]
  %s5 = inlined_call_operand.vmem [shape: f32[8,64], index: 5, kind: input, shape index: {}]
  %s6 = inlined_call_operand.vmem [shape: f32[1,64], index: 6, kind: input, shape index: {}]
  %s7 = inlined_call_operand.vmem [shape: f32[1,64], index: 7, kind: input, shape index: {}]
  %s8 = inlined_call_operand.<no memory space> [shape: f32[1,1], index: 8, kind: input, shape index: {}]
  %s9 = inlined_call_operand.hbm [shape: f32[1,1,128], index: 9, kind: output, shape index: {}]
  %s10 = sld [smem:[#allocation0]]
  $region46: #{tpu_custom_call.1} parent=0
    _
  %s12 = ssub.s32 1, %s10
  %s13 = scalar_select 0, %s12, %s10
  %14 = sst [smem:[#allocation2]] %s8
  $region1: #{tpu_custom_call.1} parent=0
    #allocation3 [shape = 'u8[512]{0}', space=vmem, size = 0x400, scoped, tag = 'output window, operand 0, single buffered']
    #allocation4 [shape = 's32[1]{0}', space=sflag, size = 0x4, scoped, tag = 'scoped memory for tpu_custom_call.1']
    %15 = vsyncpa [#allocation4], 0
    // Predicated region
    $region2: #{tpu_custom_call.1} parent=1 // pred_check
      _
    $region3: #{tpu_custom_call.1} parent=1 // pred_check_branch
      %17 = sbr.rel (0) target = $region5
    $region4: #{tpu_custom_call.1} parent=1 // pred_region
      _
    $region5: #{tpu_custom_call.1} parent=1 // pred_fallthru
      _
    // Predicated region
    $region6: #{tpu_custom_call.1} parent=1 // pred_check
      _
    $region7: #{tpu_custom_call.1} parent=1 // pred_check_branch
      %19 = sbr.rel (0) target = $region9
    $region8: #{tpu_custom_call.1} parent=1 // pred_region
      _
    $region9: #{tpu_custom_call.1} parent=1 // pred_fallthru
      _
    // Predicated region
    $region10: #{tpu_custom_call.1} parent=1 // pred_check
      _
    $region11: #{tpu_custom_call.1} parent=1 // pred_check_branch
      %21 = sbr.rel (0) target = $region13
    $region12: #{tpu_custom_call.1} parent=1 // pred_region
      _
    $region13: #{tpu_custom_call.1} parent=1 // pred_fallthru
      _
    // Predicated region
    $region14: #{tpu_custom_call.1} parent=1 // pred_check
      _
    $region15: #{tpu_custom_call.1} parent=1 // pred_check_branch
      %23 = sbr.rel (0) target = $region17
    $region16: #{tpu_custom_call.1} parent=1 // pred_region
      _
    $region17: #{tpu_custom_call.1} parent=1 // pred_fallthru
      _
    // Predicated region
    $region18: #{tpu_custom_call.1} parent=1 // pred_check
      _
    $region19: #{tpu_custom_call.1} parent=1 // pred_check_branch
      %25 = sbr.rel (0) target = $region21
    $region20: #{tpu_custom_call.1} parent=1 // pred_region
      _
    $region21: #{tpu_custom_call.1} parent=1 // pred_fallthru
      _
    // Predicated region
    $region22: #{tpu_custom_call.1} parent=1 // pred_check
      _
    $region23: #{tpu_custom_call.1} parent=1 // pred_check_branch
      %27 = sbr.rel (0) target = $region25
    $region24: #{tpu_custom_call.1} parent=1 // pred_region
      _
    $region25: #{tpu_custom_call.1} parent=1 // pred_fallthru
      _
    // Predicated region
    $region26: #{tpu_custom_call.1} parent=1 // pred_check
      _
    $region27: #{tpu_custom_call.1} parent=1 // pred_check_branch
      %29 = sbr.rel (0) target = $region29
    $region28: #{tpu_custom_call.1} parent=1 // pred_region
      _
    $region29: #{tpu_custom_call.1} parent=1 // pred_fallthru
      _
    // Predicated region
    $region30: #{tpu_custom_call.1} parent=1 // pred_check
      _
    $region31: #{tpu_custom_call.1} parent=1 // pred_check_branch
      %31 = sbr.rel (0) target = $region33
    $region32: #{tpu_custom_call.1} parent=1 // pred_region
      _
    $region33: #{tpu_custom_call.1} parent=1 // pred_fallthru
      _
    // Predicated region
    $region34: #{tpu_custom_call.1} parent=1 // pred_check
      _
    $region35: #{tpu_custom_call.1} parent=1 // pred_check_branch
      %33 = sbr.rel (0) target = $region37
    $region36: #{tpu_custom_call.1} parent=1 // pred_region
      _
    $region37: #{tpu_custom_call.1} parent=1 // pred_fallthru
      _
    %v34 = vld [vmem:[%s0] sm:$0xff]
    %v35 = vld [vmem:[%s0 + $0x8] sm:$0xff]
    %v36 = vld [vmem:[%s0 + $0x10] sm:$0xff]
    %v37 = vld [vmem:[%s0 + $0x18] sm:$0xff]
    %v38 = vld [vmem:[%s0 + $0x20] sm:$0xff]
    %v39 = vld [vmem:[%s0 + $0x28] sm:$0xff]
    %v40 = vld [vmem:[%s0 + $0x30] sm:$0xff]
    %v41 = vld [vmem:[%s0 + $0x38] sm:$0xff]
    %v42 = vld [vmem:[%s0 + $0x40] sm:$0xff]
    %v43 = vld [vmem:[%s0 + $0x48] sm:$0xff]
    %v44 = vld [vmem:[%s0 + $0x50] sm:$0xff]
    %v45 = vld [vmem:[%s0 + $0x58] sm:$0xff]
    %v46 = vld [vmem:[%s0 + $0x60] sm:$0xff]
    %v47 = vld [vmem:[%s0 + $0x68] sm:$0xff]
    %v48 = vld [vmem:[%s0 + $0x70] sm:$0xff]
    %v49 = vld [vmem:[%s0 + $0x78] sm:$0xff]
    %v50 = vld [vmem:[%s3] sm:$0xff]
    %v51 = vld [vmem:[%s3 + $0x8] sm:$0xff]
    %v52 = vld [vmem:[%s1] sm:$0xff]
    %v53 = vld [vmem:[%s1 + $0x8] sm:$0xff]
    %v54 = vld [vmem:[%s1 + $0x10] sm:$0xff]
    %v55 = vld [vmem:[%s1 + $0x18] sm:$0xff]
    %v56 = vld [vmem:[%s1 + $0x20] sm:$0xff]
    %v57 = vld [vmem:[%s1 + $0x28] sm:$0xff]
    %v58 = vld [vmem:[%s1 + $0x30] sm:$0xff]
    %v59 = vld [vmem:[%s1 + $0x38] sm:$0xff]
    %v60 = vld [vmem:[%s1 + $0x40] sm:$0xff]
    %v61 = vld [vmem:[%s1 + $0x48] sm:$0xff]
    %v62 = vld [vmem:[%s1 + $0x50] sm:$0xff]
    %v63 = vld [vmem:[%s1 + $0x58] sm:$0xff]
    %v64 = vld [vmem:[%s1 + $0x60] sm:$0xff]
    %v65 = vld [vmem:[%s1 + $0x68] sm:$0xff]
    %v66 = vld [vmem:[%s1 + $0x70] sm:$0xff]
    %v67 = vld [vmem:[%s1 + $0x78] sm:$0xff]
    %v68 = vld [vmem:[%s4] sm:$0xff]
    %v69 = vld [vmem:[%s4 + $0x8] sm:$0xff]
    %v70 = vld [vmem:[%s4 + $0x10] sm:$0xff]
    %v71 = vld [vmem:[%s4 + $0x18] sm:$0xff]
    %vm72 = vcmask 261120
    %v74 = vsel %vm72, %v52, 0
    %v77 = vsel %vm72, %v53, 0
    %v80 = vsel %vm72, %v54, 0
    %v83 = vsel %vm72, %v55, 0
    %v86 = vsel %vm72, %v56, 0
    %v89 = vsel %vm72, %v57, 0
    %v92 = vsel %vm72, %v58, 0
    %v95 = vsel %vm72, %v59, 0
    %v98 = vsel %vm72, %v60, 0
    %v101 = vsel %vm72, %v61, 0
    %v104 = vsel %vm72, %v62, 0
    %v107 = vsel %vm72, %v63, 0
    %v110 = vsel %vm72, %v64, 0
    %v113 = vsel %vm72, %v65, 0
    %v116 = vsel %vm72, %v66, 0
    %v119 = vsel %vm72, %v67, 0
    %121 = vmatpush.msra.mxu0 0.0
    %122 = vmatpush.msra.mxu0 0.0
    %123 = vmatpush.msra.mxu0 0.0
    %124 = vmatpush.msra.mxu0 0.0
    %125 = vmatpush.msra.mxu0 0.0
    %126 = vmatpush.msra.mxu0 0.0
    %127 = vmatpush.msra.mxu0 0.0
    %128 = vmatpush.msra.mxu0 0.0
    %129 = vmatpush.msra.mxu0 0.0
    %130 = vmatpush.msra.mxu0 0.0
    %131 = vmatpush.msra.mxu0 0.0
    %132 = vmatpush.msra.mxu0 0.0
    %133 = vmatpush.msra.mxu0 %v71
    %134 = vmatpush.msra.mxu0 %v70
    %135 = vmatpush.msra.mxu0 %v69
    %136 = vmatpush.msra.mxu0 %v68
    %137 = vmatmul.f32.gmra.mxu0 %v74
    %v138 = vpop.f32.mrf.mxu0
    %v139 = vadd.f32 0.0, %v138
    %140 = vmatmul.f32.gmra.mxu0 %v77
    %v141 = vpop.f32.mrf.mxu0
    %v142 = vadd.f32 0.0, %v141
    %143 = vmatmul.f32.gmra.mxu0 %v80
    %v144 = vpop.f32.mrf.mxu0
    %v145 = vadd.f32 0.0, %v144
    %146 = vmatmul.f32.gmra.mxu0 %v83
    %v147 = vpop.f32.mrf.mxu0
    %v148 = vadd.f32 0.0, %v147
    %149 = vmatmul.f32.gmra.mxu0 %v86
    %v150 = vpop.f32.mrf.mxu0
    %v151 = vadd.f32 0.0, %v150
    %152 = vmatmul.f32.gmra.mxu0 %v89
    %v153 = vpop.f32.mrf.mxu0
    %v154 = vadd.f32 0.0, %v153
    %155 = vmatmul.f32.gmra.mxu0 %v92
    %v156 = vpop.f32.mrf.mxu0
    %v157 = vadd.f32 0.0, %v156
    %158 = vmatmul.f32.gmra.mxu0 %v95
    %v159 = vpop.f32.mrf.mxu0
    %v160 = vadd.f32 0.0, %v159
    %161 = vmatmul.f32.gmra.mxu0 %v98
    %v162 = vpop.f32.mrf.mxu0
    %v163 = vadd.f32 0.0, %v162
    %164 = vmatmul.f32.gmra.mxu0 %v101
    %v165 = vpop.f32.mrf.mxu0
    %v166 = vadd.f32 0.0, %v165
    %167 = vmatmul.f32.gmra.mxu0 %v104
    %v168 = vpop.f32.mrf.mxu0
    %v169 = vadd.f32 0.0, %v168
    %170 = vmatmul.f32.gmra.mxu0 %v107
    %v171 = vpop.f32.mrf.mxu0
    %v172 = vadd.f32 0.0, %v171
    %173 = vmatmul.f32.gmra.mxu0 %v110
    %v174 = vpop.f32.mrf.mxu0
    %v175 = vadd.f32 0.0, %v174
    %176 = vmatmul.f32.gmra.mxu0 %v113
    %v177 = vpop.f32.mrf.mxu0
    %v178 = vadd.f32 0.0, %v177
    %179 = vmatmul.f32.gmra.mxu0 %v116
    %v180 = vpop.f32.mrf.mxu0
    %v181 = vadd.f32 0.0, %v180
    %182 = vmatmul.f32.gmra.mxu0 %v119
    %v183 = vpop.f32.mrf.mxu0
    %v184 = vadd.f32 0.0, %v183
    %185 = vdwg.mxu0
    %vm186 = vcmask 130048
    %v188 = vsel %vm186, %v34, 0
    %v191 = vsel %vm186, %v35, 0
    %v194 = vsel %vm186, %v36, 0
    %v197 = vsel %vm186, %v37, 0
    %v200 = vsel %vm186, %v38, 0
    %v203 = vsel %vm186, %v39, 0
    %v206 = vsel %vm186, %v40, 0
    %v209 = vsel %vm186, %v41, 0
    %v212 = vsel %vm186, %v42, 0
    %v215 = vsel %vm186, %v43, 0
    %v218 = vsel %vm186, %v44, 0
    %v221 = vsel %vm186, %v45, 0
    %v224 = vsel %vm186, %v46, 0
    %v227 = vsel %vm186, %v47, 0
    %v230 = vsel %vm186, %v48, 0
    %v233 = vsel %vm186, %v49, 0
    %235 = vmatpush.msra.mxu0 0.0
    %236 = vmatpush.msra.mxu0 0.0
    %237 = vmatpush.msra.mxu0 0.0
    %238 = vmatpush.msra.mxu0 0.0
    %239 = vmatpush.msra.mxu0 0.0
    %240 = vmatpush.msra.mxu0 0.0
    %241 = vmatpush.msra.mxu0 0.0
    %242 = vmatpush.msra.mxu0 0.0
    %243 = vmatpush.msra.mxu0 0.0
    %244 = vmatpush.msra.mxu0 0.0
    %245 = vmatpush.msra.mxu0 0.0
    %246 = vmatpush.msra.mxu0 0.0
    %247 = vmatpush.msra.mxu0 0.0
    %248 = vmatpush.msra.mxu0 0.0
    %249 = vmatpush.msra.mxu0 %v51
    %250 = vmatpush.msra.mxu0 %v50
    %251 = vmatmul.f32.gmra.mxu0 %v188
    %v252 = vpop.f32.mrf.mxu0
    %v253 = vadd.f32 %v139, %v252
    %254 = vmatmul.f32.gmra.mxu0 %v191
    %v255 = vpop.f32.mrf.mxu0
    %v256 = vadd.f32 %v142, %v255
    %257 = vmatmul.f32.gmra.mxu0 %v194
    %v258 = vpop.f32.mrf.mxu0
    %v259 = vadd.f32 %v145, %v258
    %260 = vmatmul.f32.gmra.mxu0 %v197
    %v261 = vpop.f32.mrf.mxu0
    %v262 = vadd.f32 %v148, %v261
    %263 = vmatmul.f32.gmra.mxu0 %v200
    %v264 = vpop.f32.mrf.mxu0
    %v265 = vadd.f32 %v151, %v264
    %266 = vmatmul.f32.gmra.mxu0 %v203
    %v267 = vpop.f32.mrf.mxu0
    %v268 = vadd.f32 %v154, %v267
    %269 = vmatmul.f32.gmra.mxu0 %v206
    %v270 = vpop.f32.mrf.mxu0
    %v271 = vadd.f32 %v157, %v270
    %272 = vmatmul.f32.gmra.mxu0 %v209
    %v273 = vpop.f32.mrf.mxu0
    %v274 = vadd.f32 %v160, %v273
    %275 = vmatmul.f32.gmra.mxu0 %v212
    %v276 = vpop.f32.mrf.mxu0
    %v277 = vadd.f32 %v163, %v276
    %278 = vmatmul.f32.gmra.mxu0 %v215
    %v279 = vpop.f32.mrf.mxu0
    %v280 = vadd.f32 %v166, %v279
    %281 = vmatmul.f32.gmra.mxu0 %v218
    %v282 = vpop.f32.mrf.mxu0
    %v283 = vadd.f32 %v169, %v282
    %284 = vmatmul.f32.gmra.mxu0 %v221
    %v285 = vpop.f32.mrf.mxu0
    %v286 = vadd.f32 %v172, %v285
    %287 = vmatmul.f32.gmra.mxu0 %v224
    %v288 = vpop.f32.mrf.mxu0
    %v289 = vadd.f32 %v175, %v288
    %290 = vmatmul.f32.gmra.mxu0 %v227
    %v291 = vpop.f32.mrf.mxu0
    %v292 = vadd.f32 %v178, %v291
    %293 = vmatmul.f32.gmra.mxu0 %v230
    %v294 = vpop.f32.mrf.mxu0
    %v295 = vadd.f32 %v181, %v294
    %296 = vmatmul.f32.gmra.mxu0 %v233
    %v297 = vpop.f32.mrf.mxu0
    %v298 = vadd.f32 %v184, %v297
    %299 = vdwg.mxu0
    %v300 = vld [vmem:[%s2] sm:$0xff]
    %v301 = vld [vmem:[%s2 + $0x8] sm:$0xff]
    %v302 = vld [vmem:[%s2 + $0x10] sm:$0xff]
    %v303 = vld [vmem:[%s2 + $0x18] sm:$0xff]
    %v304 = vld [vmem:[%s2 + $0x20] sm:$0xff]
    %v305 = vld [vmem:[%s2 + $0x28] sm:$0xff]
    %v306 = vld [vmem:[%s2 + $0x30] sm:$0xff]
    %v307 = vld [vmem:[%s2 + $0x38] sm:$0xff]
    %v308 = vld [vmem:[%s2 + $0x40] sm:$0xff]
    %v309 = vld [vmem:[%s2 + $0x48] sm:$0xff]
    %v310 = vld [vmem:[%s2 + $0x50] sm:$0xff]
    %v311 = vld [vmem:[%s2 + $0x58] sm:$0xff]
    %v312 = vld [vmem:[%s2 + $0x60] sm:$0xff]
    %v313 = vld [vmem:[%s2 + $0x68] sm:$0xff]
    %v314 = vld [vmem:[%s2 + $0x70] sm:$0xff]
    %v315 = vld [vmem:[%s2 + $0x78] sm:$0xff]
    %v316 = vld [vmem:[%s5] sm:$0xff]
    %vm317 = vcmask 64512
    %v319 = vsel %vm317, %v300, 0
    %v322 = vsel %vm317, %v301, 0
    %v325 = vsel %vm317, %v302, 0
    %v328 = vsel %vm317, %v303, 0
    %v331 = vsel %vm317, %v304, 0
    %v334 = vsel %vm317, %v305, 0
    %v337 = vsel %vm317, %v306, 0
    %v340 = vsel %vm317, %v307, 0
    %v343 = vsel %vm317, %v308, 0
    %v346 = vsel %vm317, %v309, 0
    %v349 = vsel %vm317, %v310, 0
    %v352 = vsel %vm317, %v311, 0
    %v355 = vsel %vm317, %v312, 0
    %v358 = vsel %vm317, %v313, 0
    %v361 = vsel %vm317, %v314, 0
    %v364 = vsel %vm317, %v315, 0
    %366 = vmatpush.msra.mxu0 0.0
    %367 = vmatpush.msra.mxu0 0.0
    %368 = vmatpush.msra.mxu0 0.0
    %369 = vmatpush.msra.mxu0 0.0
    %370 = vmatpush.msra.mxu0 0.0
    %371 = vmatpush.msra.mxu0 0.0
    %372 = vmatpush.msra.mxu0 0.0
    %373 = vmatpush.msra.mxu0 0.0
    %374 = vmatpush.msra.mxu0 0.0
    %375 = vmatpush.msra.mxu0 0.0
    %376 = vmatpush.msra.mxu0 0.0
    %377 = vmatpush.msra.mxu0 0.0
    %378 = vmatpush.msra.mxu0 0.0
    %379 = vmatpush.msra.mxu0 0.0
    %380 = vmatpush.msra.mxu0 0.0
    %381 = vmatpush.msra.mxu0 %v316
    %382 = vmatmul.f32.gmra.mxu0 %v319
    %v383 = vpop.f32.mrf.mxu0
    %v384 = vadd.f32 0.0, %v383
    %385 = vmatmul.f32.gmra.mxu0 %v322
    %v386 = vpop.f32.mrf.mxu0
    %v387 = vadd.f32 0.0, %v386
    %388 = vmatmul.f32.gmra.mxu0 %v325
    %v389 = vpop.f32.mrf.mxu0
    %v390 = vadd.f32 0.0, %v389
    %391 = vmatmul.f32.gmra.mxu0 %v328
    %v392 = vpop.f32.mrf.mxu0
    %v393 = vadd.f32 0.0, %v392
    %394 = vmatmul.f32.gmra.mxu0 %v331
    %v395 = vpop.f32.mrf.mxu0
    %v396 = vadd.f32 0.0, %v395
    %397 = vmatmul.f32.gmra.mxu0 %v334
    %v398 = vpop.f32.mrf.mxu0
    %v399 = vadd.f32 0.0, %v398
    %400 = vmatmul.f32.gmra.mxu0 %v337
    %v401 = vpop.f32.mrf.mxu0
    %v402 = vadd.f32 0.0, %v401
    %403 = vmatmul.f32.gmra.mxu0 %v340
    %v404 = vpop.f32.mrf.mxu0
    %v405 = vadd.f32 0.0, %v404
    %406 = vmatmul.f32.gmra.mxu0 %v343
    %v407 = vpop.f32.mrf.mxu0
    %v408 = vadd.f32 0.0, %v407
    %409 = vmatmul.f32.gmra.mxu0 %v346
    %v410 = vpop.f32.mrf.mxu0
    %v411 = vadd.f32 0.0, %v410
    %412 = vmatmul.f32.gmra.mxu0 %v349
    %v413 = vpop.f32.mrf.mxu0
    %v414 = vadd.f32 0.0, %v413
    %415 = vmatmul.f32.gmra.mxu0 %v352
    %v416 = vpop.f32.mrf.mxu0
    %v417 = vadd.f32 0.0, %v416
    %418 = vmatmul.f32.gmra.mxu0 %v355
    %v419 = vpop.f32.mrf.mxu0
    %v420 = vadd.f32 0.0, %v419
    %421 = vmatmul.f32.gmra.mxu0 %v358
    %v422 = vpop.f32.mrf.mxu0
    %v423 = vadd.f32 0.0, %v422
    %424 = vmatmul.f32.gmra.mxu0 %v361
    %v425 = vpop.f32.mrf.mxu0
    %v426 = vadd.f32 0.0, %v425
    %427 = vmatmul.f32.gmra.mxu0 %v364
    %v428 = vpop.f32.mrf.mxu0
    %v429 = vadd.f32 0.0, %v428
    %430 = vdwg.mxu0
    %v431 = vadd.f32 %v253, %v384
    %v432 = vadd.f32 %v256, %v387
    %v433 = vadd.f32 %v259, %v390
    %v434 = vadd.f32 %v262, %v393
    %v435 = vadd.f32 %v265, %v396
    %v436 = vadd.f32 %v268, %v399
    %v437 = vadd.f32 %v271, %v402
    %v438 = vadd.f32 %v274, %v405
    %v439 = vadd.f32 %v277, %v408
    %v440 = vadd.f32 %v280, %v411
    %v441 = vadd.f32 %v283, %v414
    %v442 = vadd.f32 %v286, %v417
    %v443 = vadd.f32 %v289, %v420
    %v444 = vadd.f32 %v292, %v423
    %v445 = vadd.f32 %v295, %v426
    %v446 = vadd.f32 %v298, %v429
    %v447 = vld [vmem:[%s6] sm:$0x1]
    %v449 = vperm.slane %v447, 0
    %v451 = vadd.f32 %v431, %v449
    %v452 = vadd.f32 %v432, %v449
    %v453 = vadd.f32 %v433, %v449
    %v454 = vadd.f32 %v434, %v449
    %v455 = vadd.f32 %v435, %v449
    %v456 = vadd.f32 %v436, %v449
    %v457 = vadd.f32 %v437, %v449
    %v458 = vadd.f32 %v438, %v449
    %v459 = vadd.f32 %v439, %v449
    %v460 = vadd.f32 %v440, %v449
    %v461 = vadd.f32 %v441, %v449
    %v462 = vadd.f32 %v442, %v449
    %v463 = vadd.f32 %v443, %v449
    %v464 = vadd.f32 %v444, %v449
    %v465 = vadd.f32 %v445, %v449
    %v466 = vadd.f32 %v446, %v449
    %v467 = vmax.f32 %v451, 0.0
    %v468 = vmax.f32 %v452, 0.0
    %v469 = vmax.f32 %v453, 0.0
    %v470 = vmax.f32 %v454, 0.0
    %v471 = vmax.f32 %v455, 0.0
    %v472 = vmax.f32 %v456, 0.0
    %v473 = vmax.f32 %v457, 0.0
    %v474 = vmax.f32 %v458, 0.0
    %v475 = vmax.f32 %v459, 0.0
    %v476 = vmax.f32 %v460, 0.0
    %v477 = vmax.f32 %v461, 0.0
    %v478 = vmax.f32 %v462, 0.0
    %v479 = vmax.f32 %v463, 0.0
    %v480 = vmax.f32 %v464, 0.0
    %v481 = vmax.f32 %v465, 0.0
    %v482 = vmax.f32 %v466, 0.0
    %v483 = vld [vmem:[%s7] sm:$0x1]
    %v485 = vperm.slane %v483, 0
    %v487 = vmul.f32 %v467, %v485
    %v488 = vmul.f32 %v468, %v485
    %v489 = vmul.f32 %v469, %v485
    %v490 = vmul.f32 %v470, %v485
    %v491 = vmul.f32 %v471, %v485
    %v492 = vmul.f32 %v472, %v485
    %v493 = vmul.f32 %v473, %v485
    %v494 = vmul.f32 %v474, %v485
    %v495 = vmul.f32 %v475, %v485
    %v496 = vmul.f32 %v476, %v485
    %v497 = vmul.f32 %v477, %v485
    %v498 = vmul.f32 %v478, %v485
    %v499 = vmul.f32 %v479, %v485
    %v500 = vmul.f32 %v480, %v485
    %v501 = vmul.f32 %v481, %v485
    %v502 = vmul.f32 %v482, %v485
    %vm503 = vcmask 523264
    %v504 = vsel %vm503, %v487, 0.0
    %505 = vadd.xlane.f32.xlu0 %v504
    %v506 = vpop.xlane.xlu0 %505
    %v507 = vsel %vm503, %v488, 0.0
    %508 = vadd.xlane.f32.xlu0 %v507
    %v509 = vpop.xlane.xlu0 %508
    %v510 = vsel %vm503, %v489, 0.0
    %511 = vadd.xlane.f32.xlu0 %v510
    %v512 = vpop.xlane.xlu0 %511
    %v513 = vsel %vm503, %v490, 0.0
    %514 = vadd.xlane.f32.xlu0 %v513
    %v515 = vpop.xlane.xlu0 %514
    %v516 = vsel %vm503, %v491, 0.0
    %517 = vadd.xlane.f32.xlu0 %v516
    %v518 = vpop.xlane.xlu0 %517
    %v519 = vsel %vm503, %v492, 0.0
    %520 = vadd.xlane.f32.xlu0 %v519
    %v521 = vpop.xlane.xlu0 %520
    %v522 = vsel %vm503, %v493, 0.0
    %523 = vadd.xlane.f32.xlu0 %v522
    %v524 = vpop.xlane.xlu0 %523
    %v525 = vsel %vm503, %v494, 0.0
    %526 = vadd.xlane.f32.xlu0 %v525
    %v527 = vpop.xlane.xlu0 %526
    %v528 = vsel %vm503, %v495, 0.0
    %529 = vadd.xlane.f32.xlu0 %v528
    %v530 = vpop.xlane.xlu0 %529
    %v531 = vsel %vm503, %v496, 0.0
    %532 = vadd.xlane.f32.xlu0 %v531
    %v533 = vpop.xlane.xlu0 %532
    %v534 = vsel %vm503, %v497, 0.0
    %535 = vadd.xlane.f32.xlu0 %v534
    %v536 = vpop.xlane.xlu0 %535
    %v537 = vsel %vm503, %v498, 0.0
    %538 = vadd.xlane.f32.xlu0 %v537
    %v539 = vpop.xlane.xlu0 %538
    %v540 = vsel %vm503, %v499, 0.0
    %541 = vadd.xlane.f32.xlu0 %v540
    %v542 = vpop.xlane.xlu0 %541
    %v543 = vsel %vm503, %v500, 0.0
    %544 = vadd.xlane.f32.xlu0 %v543
    %v545 = vpop.xlane.xlu0 %544
    %v546 = vsel %vm503, %v501, 0.0
    %547 = vadd.xlane.f32.xlu0 %v546
    %v548 = vpop.xlane.xlu0 %547
    %v549 = vsel %vm503, %v502, 0.0
    %550 = vadd.xlane.f32.xlu0 %v549
    %v551 = vpop.xlane.xlu0 %550
    %552 = vxpose.xlu0.b32.start [1/16] %v506, 128
    %553 = vxpose.xlu0.b32.cont [2/16] %v509, 128
    %554 = vxpose.xlu0.b32.cont [3/16] %v512, 128
    %555 = vxpose.xlu0.b32.cont [4/16] %v515, 128
    %556 = vxpose.xlu0.b32.cont [5/16] %v518, 128
    %557 = vxpose.xlu0.b32.cont [6/16] %v521, 128
    %558 = vxpose.xlu0.b32.cont [7/16] %v524, 128
    %559 = vxpose.xlu0.b32.cont [8/16] %v527, 128
    %560 = vxpose.xlu0.b32.cont [9/16] %v530, 128
    %561 = vxpose.xlu0.b32.cont [10/16] %v533, 128
    %562 = vxpose.xlu0.b32.cont [11/16] %v536, 128
    %563 = vxpose.xlu0.b32.cont [12/16] %v539, 128
    %564 = vxpose.xlu0.b32.cont [13/16] %v542, 128
    %565 = vxpose.xlu0.b32.cont [14/16] %v545, 128
    %566 = vxpose.xlu0.b32.cont [15/16] %v548, 128
    %567 = vxpose.xlu0.b32.end [16/16] %v551, 128
    %v568 = vpop.trf.xlu0
    %v569 = vpop.trf.xlu0
    %v570 = vpop.trf.xlu0
    %v571 = vpop.trf.xlu0
    %v572 = vpop.trf.xlu0
    %v573 = vpop.trf.xlu0
    %v574 = vpop.trf.xlu0
    %v575 = vpop.trf.xlu0
    %v576 = vpop.trf.xlu0
    %v577 = vpop.trf.xlu0
    %v578 = vpop.trf.xlu0
    %v579 = vpop.trf.xlu0
    %v580 = vpop.trf.xlu0
    %v581 = vpop.trf.xlu0
    %v582 = vpop.trf.xlu0
    %v583 = vpop.trf.xlu0
    %s584 = sld [smem:[#allocation2]]
    %v585 = vstv %s584
    %v586 = vadd.f32 %v568, %v585
    %587 = vst [vmem:[#allocation3] sm:$0x1] %v586
    // Predicated region
    $region38: #{tpu_custom_call.1} parent=1 // pred_check
      _
    $region39: #{tpu_custom_call.1} parent=1 // pred_check_branch
      %589 = sbr.rel (0) target = $region41
    $region40: #{tpu_custom_call.1} parent=1 // pred_region
      %591 = vsyncadd [#allocation4], 0
      %s593 = sshll.u32 [#allocation3], 4
      %s594 = int_to_ptr.vmem [resolvable:$true] %s593
      %s595 = sshll.u32 %s9, 4
      %s596 = int_to_ptr.hbm [resolvable:$true] %s595
      %598 = dma.vmem_to_hbm [thread:$0]  %s594, 16, %s596, [#allocation4]
    $region41: #{tpu_custom_call.1} parent=1 // pred_fallthru
      _
    // Predicated region
    $region42: #{tpu_custom_call.1} parent=1 // pred_check
      _
    $region43: #{tpu_custom_call.1} parent=1 // pred_check_branch
      %600 = sbr.rel (0) target = $region45
    $region44: #{tpu_custom_call.1} parent=1 // pred_region
      %602 = dma.done [#allocation4], 16
    $region45: #{tpu_custom_call.1} parent=1 // pred_fallthru
      _
    %603 = vsyncpa [#allocation4], 1

</llo_original>
